<compile_context>
chip_gen: v7x
topology: tpu7x:2x2x1
jax: 0.10.0
libtpu: 0.0.40
codegen_flags: <defaults>
</compile_context>

<pallas_src>
import functools

import jax
import jax.numpy as jnp
from jax import lax
from jax.experimental import pallas as pl
from jax.experimental.pallas import tpu as pltpu


def _default_vmem_limit():
    """Generation-aware scoped-VMEM limit (~3/4 of physical, capped)."""
    try:
        cap = int(pltpu.get_tpu_info().vmem_capacity_bytes)
        return min(cap * 3 // 4, 100 * 1024 * 1024)
    except Exception:  # not on TPU / API mismatch -> let the compiler default rule
        return None


_VMEM_LIMIT = _default_vmem_limit()


# ----------------------------------------------------------------------------
# Fused 3x3-conv Pallas kernel
# ----------------------------------------------------------------------------
def _conv3x3_kernel(*refs, cin, stride, upsample, has_bn, has_res,
                    apply_sigmoid, emit_stats):
    it = iter(refs)
    x_ref = next(it)
    w_ref = next(it)
    b_ref = next(it)
    scale_ref = next(it) if has_bn else None
    shift_ref = next(it) if has_bn else None
    res_ref = next(it) if has_res else None
    out_ref = next(it)
    sum_ref = next(it) if emit_stats else None
    sq_ref = next(it) if emit_stats else None

    cout = w_ref.shape[1]
    x = x_ref[0]                      # stride1: (H, W, C); stride2: (H, W/2, 2C)

    if has_bn:
        # Fused BatchNorm (per-channel scale/shift) + SiLU prologue, f32 math.
        # Applied before the in-kernel zero padding, matching norm -> silu -> conv.
        z = x.astype(jnp.float32) * scale_ref[...] + shift_ref[...]
        x = (z * jax.nn.sigmoid(z)).astype(jnp.bfloat16)

    if stride == 1:
        if upsample:
            # Nearest-2x upsample folded into this conv: replicate rows/cols in VMEM.
            h, w, c = x.shape
            x = jnp.broadcast_to(x[:, None], (h, 2, w, c)).reshape(2 * h, w, c)
            x = jnp.broadcast_to(x[:, :, None], (2 * h, w, 2, c)).reshape(2 * h, 2 * w, c)
        ho, wo, c = x.shape
        # In-kernel zero padding (padding=1).
        zc = jnp.zeros((ho, 1, c), x.dtype)
        xc = jnp.concatenate([zc, x, zc], axis=1)           # (ho, wo+2, c)
        zr = jnp.zeros((1, wo + 2, c), x.dtype)
        xp = jnp.concatenate([zr, xc, zr], axis=0)          # (ho+2, wo+2, c)
        taps = [xp[di:di + ho, dj:dj + wo, :]
                for di in range(3) for dj in range(3)]
    else:
        # Stride-2: the wrapper passed a free (W, C) -> (W/2, 2C) pair-merged view.
        hin, wp, c2 = x.shape                                # c2 == 2*cin, wp == W/2
        ho, wo = hin // 2, wp
        zc = jnp.zeros((hin, 1, c2), x.dtype)
        xc = jnp.concatenate([zc, x], axis=1)                # left zero pair-column
        zr = jnp.zeros((1, wp + 1, c2), x.dtype)
        xr = jnp.concatenate([zr, xc, zr], axis=0)           # top/bottom zero rows
        xq = xr.reshape(ho + 1, 2, wp + 1, c2)               # leading-dim row pairing
        taps = []
        for di in range(3):
            for dj in range(3):
                ps, par = (dj + 1) // 2, (dj + 1) % 2
                taps.append(xq[di // 2:di // 2 + ho, di % 2,
                               ps:ps + wo, par * cin:(par + 1) * cin])

    # One long-K MXU matmul: (ho*wo, 9*cin) x (9*cin, cout), f32 accumulation.
    patch = jnp.concatenate(taps, axis=-1).reshape(ho * wo, 9 * cin)
    acc = jnp.dot(patch, w_ref[...], preferred_element_type=jnp.float32)
    acc = acc + b_ref[...]

    if has_res:                                              # fused residual add
        acc = acc + res_ref[0].reshape(ho * wo, cout).astype(jnp.float32)

    if emit_stats:                                           # feeds the next BatchNorm
        sum_ref[...] = jnp.sum(acc, axis=0, keepdims=True).reshape(1, 1, cout)
        sq_ref[...] = jnp.sum(acc * acc, axis=0, keepdims=True).reshape(1, 1, cout)

    if apply_sigmoid:
        acc = jax.nn.sigmoid(acc)

    out_ref[...] = acc.reshape(1, ho, wo, cout).astype(out_ref.dtype)


def conv3x3(x, p, *, stride=1, upsample=False, bn=None, residual=None,
            apply_sigmoid=False, emit_stats=False, out_dtype=jnp.bfloat16):
    """Fused 3x3 conv (stride 1 or 2, padding 1) as one Pallas call.

    Optional fusions: nearest-2x upsample of the input, BatchNorm+SiLU prologue
    (`bn=(scale, shift)`), residual add, sigmoid epilogue, batch-stat outputs.
    """
    assert stride in (1, 2)
    assert not (stride == 2 and (bn is not None or upsample))
    b_sz, hin, win, cin = x.shape
    cout = p["b"].shape[0]

    if stride == 1:
        ho, wo = (2 * hin, 2 * win) if upsample else (hin, win)
        x_in = x
        in_block = (1, hin, win, cin)
    else:
        assert hin % 2 == 0 and win % 2 == 0
        ho, wo = hin // 2, win // 2
        x_in = x.reshape(b_sz, hin, win // 2, 2 * cin)   # free pair-merge reshape
        in_block = (1, hin, win // 2, 2 * cin)

    # Crude per-step VMEM estimate (input + weights double-buffered, patch, acc, out).
    est = (2 * hin * win * cin * 2 + 2 * 9 * cin * cout * 2
           + ho * wo * (9 * cin * 2 * 2 + cout * 6))
    if est > 20 * 1024 * 1024:
        # TODO(synk): add an H-tiled path (halo rows via a second BlockSpec or
        # pltpu.emit_pipeline) for feature maps too large for one VMEM block.
        raise NotImplementedError("feature map too large for single-block conv3x3")

    in_specs = [
        pl.BlockSpec(in_block, lambda bi: (bi, 0, 0, 0)),
        pl.BlockSpec((9 * cin, cout), lambda bi: (0, 0)),
        pl.BlockSpec((1, cout), lambda bi: (0, 0)),
    ]
    args = [x_in, p["w"], p["b"].reshape(1, cout).astype(jnp.float32)]
    if bn is not None:
        scale, shift = bn
        in_specs += [pl.BlockSpec((1, cin), lambda bi: (0, 0))] * 2
        args += [scale.reshape(1, cin).astype(jnp.float32),
                 shift.reshape(1, cin).astype(jnp.float32)]
    if residual is not None:
        in_specs.append(pl.BlockSpec((1, ho, wo, cout), lambda bi: (bi, 0, 0, 0)))
        args.append(residual)

    out_shapes = [jax.ShapeDtypeStruct((b_sz, ho, wo, cout), out_dtype)]
    out_specs = [pl.BlockSpec((1, ho, wo, cout), lambda bi: (bi, 0, 0, 0))]
    if emit_stats:
        out_shapes += [jax.ShapeDtypeStruct((b_sz, 1, cout), jnp.float32)] * 2
        out_specs += [pl.BlockSpec((1, 1, cout), lambda bi: (bi, 0, 0))] * 2

    kern = functools.partial(
        _conv3x3_kernel, cin=cin, stride=stride, upsample=upsample,
        has_bn=bn is not None, has_res=residual is not None,
        apply_sigmoid=apply_sigmoid, emit_stats=emit_stats)

    outs = pl.pallas_call(
        kern,
        grid=(b_sz,),
        in_specs=in_specs,
        out_specs=tuple(out_specs) if emit_stats else out_specs[0],
        out_shape=tuple(out_shapes) if emit_stats else out_shapes[0],
        compiler_params=pltpu.CompilerParams(
            dimension_semantics=("parallel",),
            vmem_limit_bytes=_VMEM_LIMIT),
    )(*args)

    if not emit_stats:
        return outs
    y, s1, s2 = outs
    n = float(b_sz * ho * wo)
    mean = jnp.sum(s1, axis=(0, 1)) / n
    # TODO(synk): E[x^2]-E[x]^2 in f32 can cancel for large-mean channels; a
    # shifted / Welford accumulation would be more robust.
    var = jnp.sum(s2, axis=(0, 1)) / n - mean * mean        # biased var (training-mode BN)
    return y, mean, var


# ----------------------------------------------------------------------------
# Network glue
# ----------------------------------------------------------------------------
def _bn_scale_shift(mean, var, gamma, beta, eps=1e-5):
    rstd = lax.rsqrt(jnp.maximum(var, 0.0) + eps)
    scale = gamma * rstd
    shift = beta - mean * scale
    return scale, shift


def resnet_block(x, x_mean, x_var, p):
    """ResnetBlockAE (in_channels == out_channels -> nin_shortcut is Identity)."""
    s1, t1 = _bn_scale_shift(x_mean, x_var, p["bn1_g"], p["bn1_b"])
    h, h_mean, h_var = conv3x3(x, p["conv1"], bn=(s1, t1), emit_stats=True)
    s2, t2 = _bn_scale_shift(h_mean, h_var, p["bn2_g"], p["bn2_b"])
    return conv3x3(h, p["conv2"], bn=(s2, t2), residual=x)


# ----------------------------------------------------------------------------
# Deterministic parameter construction (shapes from the PyTorch __init__)
# ----------------------------------------------------------------------------
def _conv_p(key, cin, cout):
    k1, k2 = jax.random.split(key)
    w = jax.random.normal(k1, (3, 3, cin, cout), jnp.float32) * ((9 * cin) ** -0.5)
    b = jax.random.normal(k2, (cout,), jnp.float32) * 0.01
    return {"w": w.reshape(9 * cin, cout).astype(jnp.bfloat16), "b": b}


def _res_p(key, c):
    ks = jax.random.split(key, 2)
    return {
        "bn1_g": jnp.ones((c,), jnp.float32), "bn1_b": jnp.zeros((c,), jnp.float32),
        "conv1": _conv_p(ks[0], c, c),
        "bn2_g": jnp.ones((c,), jnp.float32), "bn2_b": jnp.zeros((c,), jnp.float32),
        "conv2": _conv_p(ks[1], c, c),
    }


def init_autoencoder_params(key, latent_channels=4):
    ks = jax.random.split(key, 14)
    enc = {"c0": _conv_p(ks[0], 1, 64), "r1": _res_p(ks[1], 64),
           "c2": _conv_p(ks[2], 64, 128), "r3": _res_p(ks[3], 128),
           "c4": _conv_p(ks[4], 128, 256), "r5": _res_p(ks[5], 256),
           "c6": _conv_p(ks[6], 256, latent_channels)}
    dec = {"c0": _conv_p(ks[7], latent_channels, 256), "r1": _res_p(ks[8], 256),
           "c2": _conv_p(ks[9], 256, 128), "r3": _res_p(ks[10], 128),
           "c4": _conv_p(ks[11], 128, 64), "r5": _res_p(ks[12], 64),
           "c6": _conv_p(ks[13], 64, 1)}
    return {"enc": enc, "dec": dec}


# ----------------------------------------------------------------------------
# Autoencoder forward (matches the PyTorch module semantics; training-mode BN)
# ----------------------------------------------------------------------------
def autoencoder_forward(params, x_nchw):
    if x_nchw.ndim == 3:                             # x.unsqueeze(1)
        x_nchw = x_nchw[:, None, :, :]
    b, _, h0, w0 = x_nchw.shape
    assert h0 % 8 == 0 and w0 % 8 == 0, "spatial dims must be multiples of 8"
    # TODO(synk): lane-dense (spatial-on-lanes) layouts for the Cin=1 / Cout in
    # {1,4} head convs would remove the masked vld/vst on those tiny layers.
    x = jnp.transpose(x_nchw, (0, 2, 3, 1)).astype(jnp.bfloat16)   # NCHW -> NHWC

    e = params["enc"]
    h, m, v = conv3x3(x, e["c0"], emit_stats=True)            # Conv2d(1,64,3,1,1)
    h = resnet_block(h, m, v, e["r1"])                        # ResnetBlockAE(64,64)
    h, m, v = conv3x3(h, e["c2"], stride=2, emit_stats=True)  # Conv2d(64,128,3,2,1)
    h = resnet_block(h, m, v, e["r3"])                        # ResnetBlockAE(128,128)
    h, m, v = conv3x3(h, e["c4"], stride=2, emit_stats=True)  # Conv2d(128,256,3,2,1)
    h = resnet_block(h, m, v, e["r5"])                        # ResnetBlockAE(256,256)
    h = conv3x3(h, e["c6"], stride=2)                         # Conv2d(256,4,3,2,1)

    d = params["dec"]
    h, m, v = conv3x3(h, d["c0"], emit_stats=True)            # Conv2d(4,256,3,1,1)
    h = resnet_block(h, m, v, d["r1"])                        # ResnetBlockAE(256,256)
    h, m, v = conv3x3(h, d["c2"], upsample=True, emit_stats=True)   # Up2x + Conv(256,128)
    h = resnet_block(h, m, v, d["r3"])                        # ResnetBlockAE(128,128)
    h, m, v = conv3x3(h, d["c4"], upsample=True, emit_stats=True)   # Up2x + Conv(128,64)
    h = resnet_block(h, m, v, d["r5"])                        # ResnetBlockAE(64,64)
    h = conv3x3(h, d["c6"], upsample=True, apply_sigmoid=True,
                out_dtype=jnp.float32)                        # Up2x + Conv(64,1) + Sigmoid

    # F.interpolate(..., mode='bilinear', align_corners=False); identity at these sizes.
    h = jax.image.resize(h, (b, h0, w0, h.shape[-1]), method="bilinear")
    return jnp.transpose(h, (0, 3, 1, 2))                     # NHWC -> NCHW


# ----------------------------------------------------------------------------
# Self-test
# ----------------------------------------------------------------------------
def _ref_conv(x_bf16, p, stride=1, upsample=False):
    """Pure-JAX reference for a single fused conv (same bf16-rounded weights)."""
    cout = p["b"].shape[0]
    w = p["w"].astype(jnp.float32).reshape(3, 3, -1, cout)
    xf = x_bf16.astype(jnp.float32)
    if upsample:
        xf = jnp.repeat(jnp.repeat(xf, 2, axis=1), 2, axis=2)
    y = lax.conv_general_dilated(
        xf, w, window_strides=(stride, stride), padding=((1, 1), (1, 1)),
        dimension_numbers=("NHWC", "HWIO", "NHWC"))
    return y + p["b"].astype(jnp.float32)


if __name__ == "__main__":
    key = jax.random.PRNGKey(0)
    pkey, xkey, tkey = jax.random.split(key, 3)

    # Unit checks of the fused conv kernel (stride-1 / stride-2 / upsample-fused).
    ck = jax.random.split(tkey, 2)
    xt = jax.random.normal(ck[0], (2, 8, 8, 64), jnp.float32).astype(jnp.bfloat16)
    cp = _conv_p(ck[1], 64, 128)
    for kwargs in ({"stride": 1}, {"stride": 2}, {"upsample": True}):
        y_k = conv3x3(xt, cp, **kwargs).astype(jnp.float32)
        y_r = _ref_conv(xt, cp, **kwargs)
        err = float(jnp.max(jnp.abs(y_k - y_r)))
        assert err < 5e-2, (kwargs, err)

    # Full autoencoder forward: batch=2, 1 channel, 16x16 (divisible by 8).
    params = init_autoencoder_params(pkey, latent_channels=4)
    x = jax.random.normal(xkey, (2, 1, 16, 16), jnp.float32)

    fwd = jax.jit(autoencoder_forward)
    y = fwd(params, x)
    jax.block_until_ready(y)

    assert y.shape == (2, 1, 16, 16), y.shape
    assert bool(jnp.all(jnp.isfinite(y)))
    assert bool(jnp.all((y >= -1e-3) & (y <= 1.0 + 1e-3)))   # sigmoid range
    print("KERNEL_OK")
</pallas_src>

<mosaic_0001>
module attributes {stable_mosaic.version = 11 : i64} {
  func.func @_conv3x3_kernel(%arg0: i32, %arg1: memref<1x8x8x64xbf16, #tpu.memory_space<vmem>>, %arg2: memref<576x128xbf16, #tpu.memory_space<vmem>>, %arg3: memref<1x128xf32, #tpu.memory_space<vmem>>, %arg4: memref<1x8x8x128xbf16, #tpu.memory_space<vmem>>) attributes {dimension_semantics = [#tpu.dimension_semantics<parallel>], iteration_bounds = array<i64: 2>, scalar_prefetch = 0 : i64, scratch_operands = 0 : i64, tpu.core_type = #tpu.core_type<tc>, window_params = [{transform_indices = @transform_0, window_bounds = array<i64: 1, 8, 8, 64>}, {pipeline_mode = #tpu.pipeline_mode<synchronous>, transform_indices = @transform_1, window_bounds = array<i64: 576, 128>}, {pipeline_mode = #tpu.pipeline_mode<synchronous>, transform_indices = @transform_2, window_bounds = array<i64: 1, 128>}, {transform_indices = @transform_3, window_bounds = array<i64: 1, 8, 8, 128>}]} {
    %c0 = arith.constant 0 : index
    %c0_0 = arith.constant 0 : index
    %c0_1 = arith.constant 0 : index
    %c0_2 = arith.constant 0 : index
    %0 = vector.load %arg1[%c0, %c0_0, %c0_1, %c0_2] : memref<1x8x8x64xbf16, #tpu.memory_space<vmem>>, vector<1x8x8x64xbf16>
    %1 = vector.shape_cast %0 : vector<1x8x8x64xbf16> to vector<8x8x64xbf16>
    %cst = arith.constant 0.000000e+00 : bf16
    %2 = vector.broadcast %cst : bf16 to vector<8x1x64xbf16>
    %3 = tpu.concatenate %2, %1, %2 in 1 : vector<8x1x64xbf16>, vector<8x8x64xbf16>, vector<8x1x64xbf16> -> vector<8x10x64xbf16>
    %cst_3 = arith.constant 0.000000e+00 : bf16
    %4 = vector.broadcast %cst_3 : bf16 to vector<1x10x64xbf16>
    %5 = tpu.concatenate %4, %3, %4 in 0 : vector<1x10x64xbf16>, vector<8x10x64xbf16>, vector<1x10x64xbf16> -> vector<10x10x64xbf16>
    %6 = vector.extract_strided_slice %5 {offsets = [0, 0, 0], sizes = [8, 8, 64], strides = [1, 1, 1]} : vector<10x10x64xbf16> to vector<8x8x64xbf16>
    %7 = vector.extract_strided_slice %5 {offsets = [0, 1, 0], sizes = [8, 8, 64], strides = [1, 1, 1]} : vector<10x10x64xbf16> to vector<8x8x64xbf16>
    %8 = vector.extract_strided_slice %5 {offsets = [0, 2, 0], sizes = [8, 8, 64], strides = [1, 1, 1]} : vector<10x10x64xbf16> to vector<8x8x64xbf16>
    %9 = vector.extract_strided_slice %5 {offsets = [1, 0, 0], sizes = [8, 8, 64], strides = [1, 1, 1]} : vector<10x10x64xbf16> to vector<8x8x64xbf16>
    %10 = vector.extract_strided_slice %5 {offsets = [1, 1, 0], sizes = [8, 8, 64], strides = [1, 1, 1]} : vector<10x10x64xbf16> to vector<8x8x64xbf16>
    %11 = vector.extract_strided_slice %5 {offsets = [1, 2, 0], sizes = [8, 8, 64], strides = [1, 1, 1]} : vector<10x10x64xbf16> to vector<8x8x64xbf16>
    %12 = vector.extract_strided_slice %5 {offsets = [2, 0, 0], sizes = [8, 8, 64], strides = [1, 1, 1]} : vector<10x10x64xbf16> to vector<8x8x64xbf16>
    %13 = vector.extract_strided_slice %5 {offsets = [2, 1, 0], sizes = [8, 8, 64], strides = [1, 1, 1]} : vector<10x10x64xbf16> to vector<8x8x64xbf16>
    %14 = vector.extract_strided_slice %5 {offsets = [2, 2, 0], sizes = [8, 8, 64], strides = [1, 1, 1]} : vector<10x10x64xbf16> to vector<8x8x64xbf16>
    %15 = tpu.concatenate %6, %7, %8, %9, %10, %11, %12, %13, %14 in 2 : vector<8x8x64xbf16>, vector<8x8x64xbf16>, vector<8x8x64xbf16>, vector<8x8x64xbf16>, vector<8x8x64xbf16>, vector<8x8x64xbf16>, vector<8x8x64xbf16>, vector<8x8x64xbf16>, vector<8x8x64xbf16> -> vector<8x8x576xbf16>
    %16 = vector.shape_cast %15 : vector<8x8x576xbf16> to vector<64x576xbf16>
    %c0_4 = arith.constant 0 : index
    %c0_5 = arith.constant 0 : index
    %17 = vector.load %arg2[%c0_4, %c0_5] : memref<576x128xbf16, #tpu.memory_space<vmem>>, vector<576x128xbf16>
    %cst_6 = arith.constant dense<0.000000e+00> : vector<64x128xf32>
    %18 = tpu.matmul %16, %17, %cst_6 {dimension_numbers = #tpu.dot_dimension_numbers<[1], [0], [0], [1], [0, 0, 1, 1], [], []>} : vector<64x576xbf16>, vector<576x128xbf16>, vector<64x128xf32> -> vector<64x128xf32>
    %c0_7 = arith.constant 0 : index
    %c0_8 = arith.constant 0 : index
    %19 = vector.load %arg3[%c0_7, %c0_8] : memref<1x128xf32, #tpu.memory_space<vmem>>, vector<1x128xf32>
    %20 = vector.broadcast %19 : vector<1x128xf32> to vector<64x128xf32>
    %21 = arith.addf %18, %20 : vector<64x128xf32>
    %22 = vector.shape_cast %21 : vector<64x128xf32> to vector<1x8x8x128xf32>
    %23 = arith.truncf %22 : vector<1x8x8x128xf32> to vector<1x8x8x128xbf16>
    %c0_9 = arith.constant 0 : index
    %c0_10 = arith.constant 0 : index
    %c0_11 = arith.constant 0 : index
    %c0_12 = arith.constant 0 : index
    %24 = vector.load %arg4[%c0_9, %c0_10, %c0_11, %c0_12] : memref<1x8x8x128xbf16, #tpu.memory_space<vmem>>, vector<1x8x8x128xbf16>
    tpu.vector_store %arg4[%c0_9, %c0_10, %c0_11, %c0_12], %23 {strides = array<i32>} : memref<1x8x8x128xbf16, #tpu.memory_space<vmem>>, vector<1x8x8x128xbf16>,
    return
  }
  func.func @transform_0(%arg0: i32) -> (i32, i32, i32, i32) {
    %c0_i32 = arith.constant 0 : i32
    %c0_i32_0 = arith.constant 0 : i32
    %c0_i32_1 = arith.constant 0 : i32
    %c0_i32_2 = arith.constant 0 : i32
    return %arg0, %c0_i32, %c0_i32_0, %c0_i32_1 : i32, i32, i32, i32
  }
  func.func @transform_1(%arg0: i32) -> (i32, i32) {
    %c0_i32 = arith.constant 0 : i32
    %c0_i32_0 = arith.constant 0 : i32
    %c0_i32_1 = arith.constant 0 : i32
    return %c0_i32, %c0_i32_0 : i32, i32
  }
  func.func @transform_2(%arg0: i32) -> (i32, i32) {
    %c0_i32 = arith.constant 0 : i32
    %c0_i32_0 = arith.constant 0 : i32
    %c0_i32_1 = arith.constant 0 : i32
    return %c0_i32, %c0_i32_0 : i32, i32
  }
  func.func @transform_3(%arg0: i32) -> (i32, i32, i32, i32) {
    %c0_i32 = arith.constant 0 : i32
    %c0_i32_0 = arith.constant 0 : i32
    %c0_i32_1 = arith.constant 0 : i32
    %c0_i32_2 = arith.constant 0 : i32
    return %arg0, %c0_i32, %c0_i32_0, %c0_i32_1 : i32, i32, i32, i32
  }
}

</mosaic_0001>

<llo_original>
// kernel: tpu_custom_call.1
$region0: #{tpu_custom_call.1}
  #allocation0 [shape = 'u32[]', space=smem, size = 0x4, offset = 0x4, fixed_abs, tag = 'smem constant byte address 0x4 - core index']
  #allocation1 [shape = 'u32[144,128]{1,0:T(1,128)}', space=vmem, size = 0x12000, scoped, tag = 'internal scratch']
  %s0 = inlined_call_operand.hbm [shape: bf16[2,8,8,64], index: 0, kind: input, shape index: {}]
  %s1 = inlined_call_operand.hbm [shape: bf16[576,128], index: 1, kind: input, shape index: {}]
  %s2 = inlined_call_operand.vmem [shape: f32[1,128], index: 2, kind: input, shape index: {}]
  %s3 = inlined_call_operand.hbm [shape: bf16[2,8,8,128], index: 3, kind: output, shape index: {}]
  %s4 = sld [smem:[#allocation0]]
  $region53: #{tpu_custom_call.1} parent=0
    _
  %s6 = ssub.s32 1, %s4
  %s7 = scalar_select 0, %s6, %s4
  $region1: #{tpu_custom_call.1} parent=0
    #allocation2 [shape = 'u8[32768]{0}', space=vmem, size = 0x8000, scoped, tag = 'input window, operand 0']
    #allocation3 [shape = 's32[2]{0}', space=sflag, size = 0x8, scoped, tag = 'scoped memory for tpu_custom_call.1']
    #allocation4 [shape = 's32[2]{0}', space=sflag, size = 0x8, scoped, tag = 'scoped memory for tpu_custom_call.1']
    #allocation5 [shape = 'u8[147456]{0}', space=vmem, size = 0x24000, scoped, tag = 'input window, operand 1, single buffered']
    #allocation6 [shape = 's32[1]{0}', space=sflag, size = 0x4, scoped, tag = 'scoped memory for tpu_custom_call.1']
    #allocation7 [shape = 'u8[32768]{0}', space=vmem, size = 0x8000, scoped, tag = 'output window, operand 0']
    %8 = vsyncpa [#allocation3], 0
    %s9 = scalar_lea.sflag [#allocation3], 1
    %10 = vsyncpa %s9, 0
    %11 = vsyncpa [#allocation6], 0
    %12 = vsyncpa [#allocation4], 0
    %s13 = scalar_lea.sflag [#allocation4], 1
    %14 = vsyncpa %s13, 0
    loop: start=0, step=1, limit=4
    $region2: #{tpu_custom_call.1} parent=1 // loop_pre_header
      _
    $region3: #{tpu_custom_call.1} parent=1 // loop_header
      %s16 = sphi 0, %s20
      %p17 = scmp.ge.s32.totalorder %s16, 4
      %s26 = sphi 0, %s28
      %s29 = sphi 0, %s26
      %s30 = sphi 0, %s29
      %s46 = sphi 0, %s30
      %s50 = sphi 0, %s50
      %s52 = sphi 0, %s50
      %s53 = sphi 0, %s52
      %s67 = sphi 0, %s53
      %s71 = sphi 0, %s71
      %s73 = sphi 0, %s71
      %s74 = sphi 0, %s73
      %s88 = sphi 0, %s74
      %s94 = sphi 0, %s96
      %s97 = sphi 0, %s94
      %s98 = sphi 0, %s97
      %s114 = sphi 0, %s98
    $region4: #{tpu_custom_call.1} parent=1 // loop_header_branch
      %19 = sbr.rel (%p17) target = $region8
    $region5: #{tpu_custom_call.1} parent=1 // loop_body
      %s21 = ssub.s32 %s16, 1
      %s22 = ssub.s32 %s16, 2
      %s23 = sadd.s32 %s16, 1
      %s24 = ssub.s32 %s16, %s23
      %p25 = scmp.eq.s32.totalorder %s24, 0
      %s27 = sadd.s32 %s26, 1
      %s28 = scalar_select %p25, %s26, %s27
      %p31 = pneg %p25
      %p32 = scmp.eq.s32.totalorder %s16, 1
      %p33 = por %p31, %p32
      %p34 = scmp.ne.s32.totalorder %s26, %s29
      %p35 = scmp.eq.s32.totalorder %s16, 0
      %p36 = por %p34, %p35
      %p37 = scmp.ne.s32.totalorder %s26, %s29
      %p38 = scmp.eq.s32.totalorder %s21, 1
      %p39 = por %p37, %p38
      %p40 = scmp.ne.s32.totalorder %s29, %s30
      %p41 = scmp.eq.s32.totalorder %s21, 0
      %p42 = por %p40, %p41
      %p43 = scmp.ne.s32.totalorder %s29, %s30
      %p44 = scmp.eq.s32.totalorder %s22, 1
      %p45 = por %p43, %p44
      %p47 = scmp.ne.s32.totalorder %s30, %s46
      %p48 = scmp.eq.s32.totalorder %s22, 0
      %p49 = por %p47, %p48
      %s51 = sadd.s32 %s50, 1
      %p54 = scmp.eq.s32.totalorder %s16, 1
      %p55 = scmp.ne.s32.totalorder %s50, %s52
      %p56 = scmp.eq.s32.totalorder %s16, 0
      %p57 = por %p55, %p56
      %p58 = scmp.ne.s32.totalorder %s50, %s52
      %p59 = scmp.eq.s32.totalorder %s21, 1
      %p60 = por %p58, %p59
      %p61 = scmp.ne.s32.totalorder %s52, %s53
      %p62 = scmp.eq.s32.totalorder %s21, 0
      %p63 = por %p61, %p62
      %p64 = scmp.ne.s32.totalorder %s52, %s53
      %p65 = scmp.eq.s32.totalorder %s22, 1
      %p66 = por %p64, %p65
      %p68 = scmp.ne.s32.totalorder %s53, %s67
      %p69 = scmp.eq.s32.totalorder %s22, 0
      %p70 = por %p68, %p69
      %s72 = sadd.s32 %s71, 1
      %p75 = scmp.eq.s32.totalorder %s16, 1
      %p76 = scmp.ne.s32.totalorder %s71, %s73
      %p77 = scmp.eq.s32.totalorder %s16, 0
      %p78 = por %p76, %p77
      %p79 = scmp.ne.s32.totalorder %s71, %s73
      %p80 = scmp.eq.s32.totalorder %s21, 1
      %p81 = por %p79, %p80
      %p82 = scmp.ne.s32.totalorder %s73, %s74
      %p83 = scmp.eq.s32.totalorder %s21, 0
      %p84 = por %p82, %p83
      %p85 = scmp.ne.s32.totalorder %s73, %s74
      %p86 = scmp.eq.s32.totalorder %s22, 1
      %p87 = por %p85, %p86
      %p89 = scmp.ne.s32.totalorder %s74, %s88
      %p90 = scmp.eq.s32.totalorder %s22, 0
      %p91 = por %p89, %p90
      %s92 = ssub.s32 %s16, %s23
      %p93 = scmp.eq.s32.totalorder %s92, 0
      %s95 = sadd.s32 %s94, 1
      %s96 = scalar_select %p93, %s94, %s95
      %p99 = pneg %p93
      %p100 = scmp.eq.s32.totalorder %s16, 1
      %p101 = por %p99, %p100
      %p102 = scmp.ne.s32.totalorder %s94, %s97
      %p103 = scmp.eq.s32.totalorder %s16, 0
      %p104 = por %p102, %p103
      %p105 = scmp.ne.s32.totalorder %s94, %s97
      %p106 = scmp.eq.s32.totalorder %s21, 1
      %p107 = por %p105, %p106
      %p108 = scmp.ne.s32.totalorder %s97, %s98
      %p109 = scmp.eq.s32.totalorder %s21, 0
      %p110 = por %p108, %p109
      %p111 = scmp.ne.s32.totalorder %s97, %s98
      %p112 = scmp.eq.s32.totalorder %s22, 1
      %p113 = por %p111, %p112
      %p115 = scmp.ne.s32.totalorder %s98, %s114
      %p116 = scmp.eq.s32.totalorder %s22, 0
      %p117 = por %p115, %p116
      %p118 = scmp.le.s32.totalorder 1, %s16
      %p119 = scmp.lt.s32.totalorder %s16, 3
      %p120 = pnand %p118, %p119
      %p121 = pneg %p120
      // Predicated region
      $region9: #{tpu_custom_call.1} parent=5 // pred_check
        _
      $region10: #{tpu_custom_call.1} parent=5 // pred_check_branch
        %123 = sbr.rel (%p120) target = $region12
      $region11: #{tpu_custom_call.1} parent=5 // pred_region
        %s124 = ssub.s32 %s16, 1
        // Predicated region
        $region13: #{tpu_custom_call.1} parent=11 // pred_check
          %p125 = pneg %p63
        $region14: #{tpu_custom_call.1} parent=11 // pred_check_branch
          %127 = sbr.rel (%p125) target = $region16
        $region15: #{tpu_custom_call.1} parent=11 // pred_region
          %s129 = ssub.s32 4608, 4608
          %130 = vsyncadd [#allocation6], %s129
          %s131 = sshll.u32 [#allocation5], 4
          %s132 = int_to_ptr.vmem [resolvable:$true] %s131
          %137 = dma.hbm_to_vmem [thread:$0]  %s1, 4608, %s132, [#allocation6], 64, 64, 4
        $region16: #{tpu_custom_call.1} parent=11 // pred_fallthru
          _
        // Predicated region
        $region17: #{tpu_custom_call.1} parent=11 // pred_check
          %p138 = pneg %p84
        $region18: #{tpu_custom_call.1} parent=11 // pred_check_branch
          %140 = sbr.rel (%p138) target = $region20
        $region19: #{tpu_custom_call.1} parent=11 // pred_region
          _
        $region20: #{tpu_custom_call.1} parent=11 // pred_fallthru
          _
      $region12: #{tpu_custom_call.1} parent=5 // pred_fallthru
        _
      %p141 = scmp.lt.s32.totalorder %s16, 2
      // Predicated region
      $region21: #{tpu_custom_call.1} parent=5 // pred_check
        %p142 = pneg %p141
      $region22: #{tpu_custom_call.1} parent=5 // pred_check_branch
        %144 = sbr.rel (%p142) target = $region24
      $region23: #{tpu_custom_call.1} parent=5 // pred_region
        // Predicated region
        $region25: #{tpu_custom_call.1} parent=23 // pred_check
          %p145 = pneg %p36
        $region26: #{tpu_custom_call.1} parent=23 // pred_check_branch
          %147 = sbr.rel (%p145) target = $region28
        $region27: #{tpu_custom_call.1} parent=23 // pred_region
          %s148 = sand.u32 %s26, 1
          %s149 = scalar_lea.sflag [#allocation3], %s148
          %s150 = sand.u32 %s26, 1
          %s151 = smul.addr %s150, 32
          %s152 = scalar_lea.vmem [#allocation2], %s151
          %s154 = ssub.s32 512, 512
          %155 = vsyncadd %s149, %s154
          %s156 = smul.addr %s16, 8
          %s157 = smul.addr %s156, 64
          %s158 = scalar_lea.hbm %s0, %s157
          %s159 = sshll.u32 %s152, 4
          %s160 = int_to_ptr.vmem [resolvable:$true] %s159
          %165 = dma.hbm_to_vmem [thread:$0]  %s158, 512, %s160, %s149, 64, 64, 4
        $region28: #{tpu_custom_call.1} parent=23 // pred_fallthru
          _
      $region24: #{tpu_custom_call.1} parent=5 // pred_fallthru
        _
      %p166 = scmp.le.s32.totalorder 1, %s16
      %p167 = scmp.lt.s32.totalorder %s16, 3
      %p168 = pnand %p166, %p167
      %p169 = pneg %p168
      // Predicated region
      $region29: #{tpu_custom_call.1} parent=5 // pred_check
        _
      $region30: #{tpu_custom_call.1} parent=5 // pred_check_branch
        %171 = sbr.rel (%p168) target = $region32
      $region31: #{tpu_custom_call.1} parent=5 // pred_region
        %s172 = ssub.s32 %s16, 1
        %s173 = sand.u32 %s29, 1
        %s174 = scalar_lea.sflag [#allocation3], %s173
        %s175 = sand.u32 %s29, 1
        %s176 = smul.addr %s175, 32
        %s177 = scalar_lea.vmem [#allocation2], %s176
        // Predicated region
        $region33: #{tpu_custom_call.1} parent=31 // pred_check
          %p178 = pneg %p42
        $region34: #{tpu_custom_call.1} parent=31 // pred_check_branch
          %180 = sbr.rel (%p178) target = $region36
        $region35: #{tpu_custom_call.1} parent=31 // pred_region
          %181 = dma.done %s174, 512
        $region36: #{tpu_custom_call.1} parent=31 // pred_fallthru
          _
        // Predicated region
        $region37: #{tpu_custom_call.1} parent=31 // pred_check
          %p182 = pneg %p63
        $region38: #{tpu_custom_call.1} parent=31 // pred_check_branch
          %184 = sbr.rel (%p182) target = $region40
        $region39: #{tpu_custom_call.1} parent=31 // pred_region
          %185 = dma.done [#allocation6], 4608
        $region40: #{tpu_custom_call.1} parent=31 // pred_fallthru
          _
        %s186 = sand.u32 %s29, 1
        %s187 = scalar_lea.sflag [#allocation3], %s186
        %s188 = sand.u32 %s29, 1
        %s189 = smul.addr %s188, 32
        %s190 = scalar_lea.vmem [#allocation2], %s189
        %p191 = pneg %p42
        %p192 = pneg %p39
        %p193 = pneg %p63
        %p194 = pneg %p60
        %p195 = pneg %p84
        %p196 = pneg %p81
        %p197 = pneg %p110
        %p198 = pneg %p107
        %s199 = sand.u32 %s97, 1
        %s200 = scalar_lea.sflag [#allocation4], %s199
        %s201 = sand.u32 %s97, 1
        %s202 = smul.addr %s201, 32
        %s203 = scalar_lea.vmem [#allocation7], %s202
        %v205 = vld [vmem:[%s177] sm:$0xf]
        %v206 = vld [vmem:[%s177 + $0x4] sm:$0xf]
        %v207 = vld [vmem:[%s177 + $0x8] sm:$0xf]
        %v208 = vld [vmem:[%s177 + $0xc] sm:$0xf]
        %v209 = vld [vmem:[%s177 + $0x10] sm:$0xf]
        %v210 = vld [vmem:[%s177 + $0x14] sm:$0xf]
        %v211 = vld [vmem:[%s177 + $0x18] sm:$0xf]
        %v212 = vld [vmem:[%s177 + $0x1c] sm:$0xf]
        %v221 = vunpack.c.l.b16 %v205
        %v222 = vunpack.c.l.b16 %v206
        %v223 = vunpack.c.l.b16 %v207
        %v224 = vunpack.c.l.b16 %v208
        %v225 = vunpack.c.l.b16 %v209
        %v226 = vunpack.c.l.b16 %v210
        %v227 = vunpack.c.l.b16 %v211
        %v228 = vunpack.c.l.b16 %v212
        %v229 = vpack.c.b16 %v221, %v221
        %v230 = vpack.c.b16 %v222, %v222
        %v231 = vpack.c.b16 %v223, %v223
        %v232 = vpack.c.b16 %v224, %v224
        %v233 = vpack.c.b16 %v225, %v225
        %v234 = vpack.c.b16 %v226, %v226
        %v235 = vpack.c.b16 %v227, %v227
        %v236 = vpack.c.b16 %v228, %v228
        %v238 = vshrl.u32 %v229, 16
        %v240 = vrot.slane %v238, 7
        %v241 = vshll.u32 %v229, 16
        %v243 = vor.u32 %v240, %v241
        %v245 = vshrl.u32 %v230, 16
        %v247 = vrot.slane %v245, 7
        %v248 = vshll.u32 %v230, 16
        %v250 = vor.u32 %v247, %v248
        %v252 = vshrl.u32 %v231, 16
        %v254 = vrot.slane %v252, 7
        %v255 = vshll.u32 %v231, 16
        %v257 = vor.u32 %v254, %v255
        %v259 = vshrl.u32 %v232, 16
        %v261 = vrot.slane %v259, 7
        %v262 = vshll.u32 %v232, 16
        %v264 = vor.u32 %v261, %v262
        %v266 = vshrl.u32 %v233, 16
        %v268 = vrot.slane %v266, 7
        %v269 = vshll.u32 %v233, 16
        %v271 = vor.u32 %v268, %v269
        %v273 = vshrl.u32 %v234, 16
        %v275 = vrot.slane %v273, 7
        %v276 = vshll.u32 %v234, 16
        %v278 = vor.u32 %v275, %v276
        %v280 = vshrl.u32 %v235, 16
        %v282 = vrot.slane %v280, 7
        %v283 = vshll.u32 %v235, 16
        %v285 = vor.u32 %v282, %v283
        %v287 = vshrl.u32 %v236, 16
        %v289 = vrot.slane %v287, 7
        %v290 = vshll.u32 %v236, 16
        %v292 = vor.u32 %v289, %v290
        %vm301 = vcmask 1040384
        %vm302 = vsmask.f32 256
        %vm303 = vmand %vm301, %vm302
        %v304 = vsel %vm303, 0, %v243
        %v305 = vsel %vm303, 0, %v250
        %v306 = vsel %vm303, 0, %v257
        %v307 = vsel %vm303, 0, %v264
        %v308 = vsel %vm303, 0, %v271
        %v309 = vsel %vm303, 0, %v278
        %v310 = vsel %vm303, 0, %v285
        %v311 = vsel %vm303, 0, %v292
        %vm312 = vcmask 1044480
        %vm313 = vsmask.f32 4352
        %vm314 = vmand %vm312, %vm313
        %v315 = vsel %vm314, %v304, 0
        %v316 = vsel %vm314, %v305, 0
        %v317 = vsel %vm314, %v306, 0
        %v318 = vsel %vm314, %v307, 0
        %v319 = vsel %vm314, %v308, 0
        %v320 = vsel %vm314, %v309, 0
        %v321 = vsel %vm314, %v310, 0
        %v322 = vsel %vm314, %v311, 0
        %v324 = vshrl.u32 0, 16
        %v326 = vshll.u32 0, 16
        %v328 = vrot.slane %v326, 1
        %v329 = vor.u32 %v324, %v328
        %v331 = vshrl.u32 %v315, 16
        %v333 = vshll.u32 %v315, 16
        %v335 = vrot.slane %v333, 1
        %v336 = vor.u32 %v331, %v335
        %v338 = vshrl.u32 %v316, 16
        %v340 = vshll.u32 %v316, 16
        %v342 = vrot.slane %v340, 1
        %v343 = vor.u32 %v338, %v342
        %v345 = vshrl.u32 %v317, 16
        %v347 = vshll.u32 %v317, 16
        %v349 = vrot.slane %v347, 1
        %v350 = vor.u32 %v345, %v349
        %v352 = vshrl.u32 %v318, 16
        %v354 = vshll.u32 %v318, 16
        %v356 = vrot.slane %v354, 1
        %v357 = vor.u32 %v352, %v356
        %v359 = vshrl.u32 %v319, 16
        %v361 = vshll.u32 %v319, 16
        %v363 = vrot.slane %v361, 1
        %v364 = vor.u32 %v359, %v363
        %v366 = vshrl.u32 %v320, 16
        %v368 = vshll.u32 %v320, 16
        %v370 = vrot.slane %v368, 1
        %v371 = vor.u32 %v366, %v370
        %v373 = vshrl.u32 %v321, 16
        %v375 = vshll.u32 %v321, 16
        %v377 = vrot.slane %v375, 1
        %v378 = vor.u32 %v373, %v377
        %379 = vrot.lane.b32.xlu0 %v329, 64
        %v380 = vpop.permute.xlu0 %379
        %381 = vrot.lane.b32.xlu0 %v336, 64
        %v382 = vpop.permute.xlu0 %381
        %383 = vrot.lane.b32.xlu0 %v343, 64
        %v384 = vpop.permute.xlu0 %383
        %385 = vrot.lane.b32.xlu0 %v350, 64
        %v386 = vpop.permute.xlu0 %385
        %387 = vrot.lane.b32.xlu0 %v357, 64
        %v388 = vpop.permute.xlu0 %387
        %389 = vrot.lane.b32.xlu0 %v364, 64
        %v390 = vpop.permute.xlu0 %389
        %391 = vrot.lane.b32.xlu0 %v371, 64
        %v392 = vpop.permute.xlu0 %391
        %393 = vrot.lane.b32.xlu0 %v378, 64
        %v394 = vpop.permute.xlu0 %393
        %v403 = vrot.slane 0, 1
        %v404 = vrot.slane %v315, 1
        %v405 = vrot.slane %v316, 1
        %v406 = vrot.slane %v317, 1
        %v407 = vrot.slane %v318, 1
        %v408 = vrot.slane %v319, 1
        %v409 = vrot.slane %v320, 1
        %v410 = vrot.slane %v321, 1
        %412 = vrot.lane.b32.xlu0 %v315, 64
        %v413 = vpop.permute.xlu0 %412
        %414 = vrot.lane.b32.xlu0 %v316, 64
        %v415 = vpop.permute.xlu0 %414
        %416 = vrot.lane.b32.xlu0 %v317, 64
        %v417 = vpop.permute.xlu0 %416
        %418 = vrot.lane.b32.xlu0 %v318, 64
        %v419 = vpop.permute.xlu0 %418
        %420 = vrot.lane.b32.xlu0 %v319, 64
        %v421 = vpop.permute.xlu0 %420
        %422 = vrot.lane.b32.xlu0 %v320, 64
        %v423 = vpop.permute.xlu0 %422
        %424 = vrot.lane.b32.xlu0 %v321, 64
        %v425 = vpop.permute.xlu0 %424
        %426 = vrot.lane.b32.xlu0 %v322, 64
        %v427 = vpop.permute.xlu0 %426
        %v429 = vshrl.u32 %v322, 16
        %v431 = vshll.u32 %v322, 16
        %v433 = vrot.slane %v431, 1
        %v434 = vor.u32 %v429, %v433
        %v435 = vrot.slane %v322, 1
        %436 = vrot.lane.b32.xlu0 %v404, 64
        %v437 = vpop.permute.xlu0 %436
        %438 = vrot.lane.b32.xlu0 %v405, 64
        %v439 = vpop.permute.xlu0 %438
        %440 = vrot.lane.b32.xlu0 %v406, 64
        %v441 = vpop.permute.xlu0 %440
        %442 = vrot.lane.b32.xlu0 %v407, 64
        %v443 = vpop.permute.xlu0 %442
        %444 = vrot.lane.b32.xlu0 %v408, 64
        %v445 = vpop.permute.xlu0 %444
        %446 = vrot.lane.b32.xlu0 %v409, 64
        %v447 = vpop.permute.xlu0 %446
        %448 = vrot.lane.b32.xlu0 %v410, 64
        %v449 = vpop.permute.xlu0 %448
        %450 = vrot.lane.b32.xlu0 %v435, 64
        %v451 = vpop.permute.xlu0 %450
        %452 = vrot.lane.b32.xlu0 %v434, 64
        %v453 = vpop.permute.xlu0 %452
        %vm454 = vcmask 523264
        %v456 = vsel %vm454, 0, %v380
        %v458 = vsel %vm454, %v315, %v382
        %v460 = vsel %vm454, %v316, %v384
        %v462 = vsel %vm454, %v317, %v386
        %v464 = vsel %vm454, %v318, %v388
        %v466 = vsel %vm454, %v319, %v390
        %v468 = vsel %vm454, %v320, %v392
        %v470 = vsel %vm454, %v321, %v394
        %v473 = vsel %vm454, %v403, %v413
        %v476 = vsel %vm454, %v404, %v415
        %v479 = vsel %vm454, %v405, %v417
        %v482 = vsel %vm454, %v406, %v419
        %v485 = vsel %vm454, %v407, %v421
        %v488 = vsel %vm454, %v408, %v423
        %v491 = vsel %vm454, %v409, %v425
        %v494 = vsel %vm454, %v410, %v427
        %v497 = vsel %vm454, %v336, %v437
        %v500 = vsel %vm454, %v343, %v439
        %v503 = vsel %vm454, %v350, %v441
        %v506 = vsel %vm454, %v357, %v443
        %v509 = vsel %vm454, %v364, %v445
        %v512 = vsel %vm454, %v371, %v447
        %v515 = vsel %vm454, %v378, %v449
        %v518 = vsel %vm454, %v434, %v451
        %v520 = vsel %vm454, %v322, %v453
        %v546 = vunpack.c.l.b16 %v456
        %v547 = vunpack.c.l.b16 %v473
        %v548 = vunpack.c.l.b16 %v497
        %v549 = vunpack.c.l.b16 %v460
        %v550 = vunpack.c.l.b16 %v405
        %v551 = vunpack.c.l.b16 %v458
        %v552 = vunpack.c.l.b16 %v476
        %v553 = vunpack.c.l.b16 %v500
        %v554 = vunpack.c.l.b16 %v462
        %v555 = vunpack.c.l.b16 %v406
        %v556 = vunpack.c.l.b16 %v479
        %v557 = vunpack.c.l.b16 %v503
        %v558 = vunpack.c.l.b16 %v464
        %v559 = vunpack.c.l.b16 %v407
        %v560 = vunpack.c.l.b16 %v482
        %v561 = vunpack.c.l.b16 %v506
        %v562 = vunpack.c.l.b16 %v466
        %v563 = vunpack.c.l.b16 %v408
        %v564 = vunpack.c.l.b16 %v485
        %v565 = vunpack.c.l.b16 %v509
        %v566 = vunpack.c.l.b16 %v468
        %v567 = vunpack.c.l.b16 %v409
        %v568 = vunpack.c.l.b16 %v488
        %v569 = vunpack.c.l.b16 %v512
        %v570 = vunpack.c.l.b16 %v470
        %v571 = vunpack.c.l.b16 %v410
        %v572 = vunpack.c.l.b16 %v491
        %v573 = vunpack.c.l.b16 %v515
        %v574 = vunpack.c.l.b16 %v520
        %v575 = vunpack.c.l.b16 %v435
        %v576 = vunpack.c.l.b16 %v494
        %v577 = vunpack.c.l.b16 %v518
        %v578 = vunpack.c.l.b16 %v403
        %v579 = vld [vmem:[#allocation5] sm:$0xf]
        %v580 = vld [vmem:[#allocation5 + $0x4] sm:$0xf]
        %v581 = vld [vmem:[#allocation5 + $0x8] sm:$0xf]
        %v582 = vld [vmem:[#allocation5 + $0xc] sm:$0xf]
        %v583 = vld [vmem:[#allocation5 + $0x10] sm:$0xf]
        %v584 = vld [vmem:[#allocation5 + $0x14] sm:$0xf]
        %v585 = vld [vmem:[#allocation5 + $0x18] sm:$0xf]
        %v586 = vld [vmem:[#allocation5 + $0x1c] sm:$0xf]
        %v587 = vld [vmem:[#allocation5 + $0x20] sm:$0xf]
        %v588 = vld [vmem:[#allocation5 + $0x24] sm:$0xf]
        %v589 = vld [vmem:[#allocation5 + $0x28] sm:$0xf]
        %v590 = vld [vmem:[#allocation5 + $0x2c] sm:$0xf]
        %v591 = vld [vmem:[#allocation5 + $0x30] sm:$0xf]
        %v592 = vld [vmem:[#allocation5 + $0x34] sm:$0xf]
        %v593 = vld [vmem:[#allocation5 + $0x38] sm:$0xf]
        %v594 = vld [vmem:[#allocation5 + $0x3c] sm:$0xf]
        %v595 = vld [vmem:[#allocation5 + $0x40] sm:$0xf]
        %v596 = vld [vmem:[#allocation5 + $0x44] sm:$0xf]
        %v597 = vld [vmem:[#allocation5 + $0x48] sm:$0xf]
        %v598 = vld [vmem:[#allocation5 + $0x4c] sm:$0xf]
        %v599 = vld [vmem:[#allocation5 + $0x50] sm:$0xf]
        %v600 = vld [vmem:[#allocation5 + $0x54] sm:$0xf]
        %v601 = vld [vmem:[#allocation5 + $0x58] sm:$0xf]
        %v602 = vld [vmem:[#allocation5 + $0x5c] sm:$0xf]
        %v603 = vld [vmem:[#allocation5 + $0x60] sm:$0xf]
        %v604 = vld [vmem:[#allocation5 + $0x64] sm:$0xf]
        %v605 = vld [vmem:[#allocation5 + $0x68] sm:$0xf]
        %v606 = vld [vmem:[#allocation5 + $0x6c] sm:$0xf]
        %v607 = vld [vmem:[#allocation5 + $0x70] sm:$0xf]
        %v608 = vld [vmem:[#allocation5 + $0x74] sm:$0xf]
        %v609 = vld [vmem:[#allocation5 + $0x78] sm:$0xf]
        %v610 = vld [vmem:[#allocation5 + $0x7c] sm:$0xf]
        %v611 = vld [vmem:[#allocation5 + $0x80] sm:$0xf]
        %v612 = vld [vmem:[#allocation5 + $0x84] sm:$0xf]
        %v613 = vld [vmem:[#allocation5 + $0x88] sm:$0xf]
        %v614 = vld [vmem:[#allocation5 + $0x8c] sm:$0xf]
        %v615 = vld [vmem:[#allocation5 + $0x90] sm:$0xf]
        %v616 = vld [vmem:[#allocation5 + $0x94] sm:$0xf]
        %v617 = vld [vmem:[#allocation5 + $0x98] sm:$0xf]
        %v618 = vld [vmem:[#allocation5 + $0x9c] sm:$0xf]
        %v619 = vld [vmem:[#allocation5 + $0xa0] sm:$0xf]
        %v620 = vld [vmem:[#allocation5 + $0xa4] sm:$0xf]
        %v621 = vld [vmem:[#allocation5 + $0xa8] sm:$0xf]
        %v622 = vld [vmem:[#allocation5 + $0xac] sm:$0xf]
        %v623 = vld [vmem:[#allocation5 + $0xb0] sm:$0xf]
        %v624 = vld [vmem:[#allocation5 + $0xb4] sm:$0xf]
        %v625 = vld [vmem:[#allocation5 + $0xb8] sm:$0xf]
        %v626 = vld [vmem:[#allocation5 + $0xbc] sm:$0xf]
        %v627 = vld [vmem:[#allocation5 + $0xc0] sm:$0xf]
        %v628 = vld [vmem:[#allocation5 + $0xc4] sm:$0xf]
        %v629 = vld [vmem:[#allocation5 + $0xc8] sm:$0xf]
        %v630 = vld [vmem:[#allocation5 + $0xcc] sm:$0xf]
        %v631 = vld [vmem:[#allocation5 + $0xd0] sm:$0xf]
        %v632 = vld [vmem:[#allocation5 + $0xd4] sm:$0xf]
        %v633 = vld [vmem:[#allocation5 + $0xd8] sm:$0xf]
        %v634 = vld [vmem:[#allocation5 + $0xdc] sm:$0xf]
        %v635 = vld [vmem:[#allocation5 + $0xe0] sm:$0xf]
        %v636 = vld [vmem:[#allocation5 + $0xe4] sm:$0xf]
        %v637 = vld [vmem:[#allocation5 + $0xe8] sm:$0xf]
        %v638 = vld [vmem:[#allocation5 + $0xec] sm:$0xf]
        %v639 = vld [vmem:[#allocation5 + $0xf0] sm:$0xf]
        %v640 = vld [vmem:[#allocation5 + $0xf4] sm:$0xf]
        %v641 = vld [vmem:[#allocation5 + $0xf8] sm:$0xf]
        %v642 = vld [vmem:[#allocation5 + $0xfc] sm:$0xf]
        %v643 = vld [vmem:[#allocation5 + $0x100] sm:$0xf]
        %v644 = vld [vmem:[#allocation5 + $0x104] sm:$0xf]
        %v645 = vld [vmem:[#allocation5 + $0x108] sm:$0xf]
        %v646 = vld [vmem:[#allocation5 + $0x10c] sm:$0xf]
        %v647 = vld [vmem:[#allocation5 + $0x110] sm:$0xf]
        %v648 = vld [vmem:[#allocation5 + $0x114] sm:$0xf]
        %v649 = vld [vmem:[#allocation5 + $0x118] sm:$0xf]
        %v650 = vld [vmem:[#allocation5 + $0x11c] sm:$0xf]
        %v651 = vld [vmem:[%s2] sm:$0x1]
        %v653 = vlaneseq
        %v654 = vshrl.u32 %v653, 7
        %v655 = vsub.s32 0, %v654
        %v656 = vrot.slane %v651, %v655
        %v658 = vpack.c.b16 %v551, %v546
        %v659 = vpack.c.b16 %v552, %v547
        %v660 = vpack.c.b16 %v553, %v548
        %v661 = vpack.c.b16 %v554, %v549
        %v662 = vpack.c.b16 %v555, %v550
        %v663 = vpack.c.b16 %v560, %v556
        %v664 = vpack.c.b16 %v561, %v557
        %v665 = vpack.c.b16 %v562, %v558
        %v666 = vpack.c.b16 %v563, %v559
        %v667 = vpack.c.b16 %v568, %v564
        %v668 = vpack.c.b16 %v569, %v565
        %v669 = vpack.c.b16 %v570, %v566
        %v670 = vpack.c.b16 %v571, %v567
        %v671 = vpack.c.b16 %v576, %v572
        %v672 = vpack.c.b16 %v577, %v573
        %v673 = vpack.c.b16 %v546, %v574
        %v674 = vpack.c.b16 %v578, %v575
        %v760 = vunpack.c.l.b16 %v579
        %v761 = vunpack.c.l.b16 %v580
        %v762 = vunpack.c.l.b16 %v581
        %v763 = vunpack.c.l.b16 %v582
        %v764 = vunpack.c.l.b16 %v583
        %v765 = vunpack.c.l.b16 %v584
        %v766 = vunpack.c.l.b16 %v585
        %v767 = vunpack.c.l.b16 %v586
        %v768 = vunpack.c.l.b16 %v587
        %v769 = vunpack.c.l.b16 %v588
        %v770 = vunpack.c.l.b16 %v589
        %v771 = vunpack.c.l.b16 %v590
        %v772 = vunpack.c.l.b16 %v591
        %v773 = vunpack.c.l.b16 %v592
        %v774 = vunpack.c.l.b16 %v593
        %v775 = vunpack.c.l.b16 %v594
        %v776 = vunpack.c.l.b16 %v595
        %v777 = vunpack.c.l.b16 %v596
        %v778 = vunpack.c.l.b16 %v597
        %v779 = vunpack.c.l.b16 %v598
        %v780 = vunpack.c.l.b16 %v599
        %v781 = vunpack.c.l.b16 %v600
        %v782 = vunpack.c.l.b16 %v601
        %v783 = vunpack.c.l.b16 %v602
        %v784 = vunpack.c.l.b16 %v603
        %v785 = vunpack.c.l.b16 %v604
        %v786 = vunpack.c.l.b16 %v605
        %v787 = vunpack.c.l.b16 %v606
        %v788 = vunpack.c.l.b16 %v607
        %v789 = vunpack.c.l.b16 %v608
        %v790 = vunpack.c.l.b16 %v609
        %v791 = vunpack.c.l.b16 %v610
        %v792 = vunpack.c.l.b16 %v611
        %v793 = vunpack.c.l.b16 %v612
        %v794 = vunpack.c.l.b16 %v613
        %v795 = vunpack.c.l.b16 %v614
        %v796 = vunpack.c.l.b16 %v615
        %v797 = vunpack.c.l.b16 %v616
        %v798 = vunpack.c.l.b16 %v617
        %v799 = vunpack.c.l.b16 %v618
        %v800 = vunpack.c.l.b16 %v619
        %v801 = vunpack.c.l.b16 %v620
        %v802 = vunpack.c.l.b16 %v621
        %v803 = vunpack.c.l.b16 %v622
        %v804 = vunpack.c.l.b16 %v623
        %v805 = vunpack.c.l.b16 %v624
        %v806 = vunpack.c.l.b16 %v625
        %v807 = vunpack.c.l.b16 %v626
        %v808 = vunpack.c.l.b16 %v627
        %v809 = vunpack.c.l.b16 %v628
        %v810 = vunpack.c.l.b16 %v629
        %v811 = vunpack.c.l.b16 %v630
        %v812 = vunpack.c.l.b16 %v631
        %v813 = vunpack.c.l.b16 %v632
        %v814 = vunpack.c.l.b16 %v633
        %v815 = vunpack.c.l.b16 %v634
        %v816 = vunpack.c.l.b16 %v635
        %v817 = vunpack.c.l.b16 %v636
        %v818 = vunpack.c.l.b16 %v637
        %v819 = vunpack.c.l.b16 %v638
        %v820 = vunpack.c.l.b16 %v639
        %v821 = vunpack.c.l.b16 %v640
        %v822 = vunpack.c.l.b16 %v641
        %v823 = vunpack.c.l.b16 %v642
        %v824 = vunpack.c.l.b16 %v643
        %v825 = vunpack.c.l.b16 %v644
        %v826 = vunpack.c.l.b16 %v645
        %v827 = vunpack.c.l.b16 %v646
        %v828 = vunpack.c.l.b16 %v647
        %v829 = vunpack.c.l.b16 %v648
        %v830 = vunpack.c.l.b16 %v649
        %v831 = vunpack.c.l.b16 %v650
        %v832 = vpack.c.b16 %v761, %v760
        %v833 = vpack.c.b16 %v763, %v762
        %v834 = vpack.c.b16 %v765, %v764
        %v835 = vpack.c.b16 %v767, %v766
        %v836 = vpack.c.b16 %v769, %v768
        %v837 = vpack.c.b16 %v771, %v770
        %v838 = vpack.c.b16 %v773, %v772
        %v839 = vpack.c.b16 %v775, %v774
        %v840 = vpack.c.b16 %v777, %v776
        %v841 = vpack.c.b16 %v779, %v778
        %v842 = vpack.c.b16 %v781, %v780
        %v843 = vpack.c.b16 %v783, %v782
        %v844 = vpack.c.b16 %v785, %v784
        %v845 = vpack.c.b16 %v787, %v786
        %v846 = vpack.c.b16 %v789, %v788
        %v847 = vpack.c.b16 %v791, %v790
        %v848 = vpack.c.b16 %v793, %v792
        %v849 = vpack.c.b16 %v795, %v794
        %v850 = vpack.c.b16 %v797, %v796
        %v851 = vpack.c.b16 %v799, %v798
        %v852 = vpack.c.b16 %v801, %v800
        %v853 = vpack.c.b16 %v803, %v802
        %v854 = vpack.c.b16 %v805, %v804
        %v855 = vpack.c.b16 %v807, %v806
        %v856 = vpack.c.b16 %v809, %v808
        %v857 = vpack.c.b16 %v811, %v810
        %v858 = vpack.c.b16 %v813, %v812
        %v859 = vpack.c.b16 %v815, %v814
        %v860 = vpack.c.b16 %v817, %v816
        %v861 = vpack.c.b16 %v819, %v818
        %v862 = vpack.c.b16 %v821, %v820
        %v863 = vpack.c.b16 %v823, %v822
        %v864 = vpack.c.b16 %v825, %v824
        %v865 = vpack.c.b16 %v827, %v826
        %v866 = vpack.c.b16 %v829, %v828
        %v867 = vpack.c.b16 %v831, %v830
        %v905 = vsel %vm454, %v662, 0
        %v908 = vsel %vm454, %v666, 0
        %v911 = vsel %vm454, %v670, 0
        %v914 = vsel %vm454, %v674, 0
        %916 = vmatprep.subr.bf16.mxu0 0
        %917 = vmatpush1.bf16.msra.mxu0 %v832
        %918 = vmatprep.subr.bf16.mxu0 0
        %919 = vmatpush1.bf16.msra.mxu0 %v833
        %920 = vmatprep.subr.bf16.mxu0 0
        %921 = vmatpush1.bf16.msra.mxu0 %v834
        %922 = vmatprep.subr.bf16.mxu0 0
        %923 = vmatpush1.bf16.msra.mxu0 %v835
        %924 = vmatprep.subr.bf16.mxu0 0
        %925 = vmatpush1.bf16.msra.mxu0 %v836
        %926 = vmatprep.subr.bf16.mxu0 0
        %927 = vmatpush1.bf16.msra.mxu0 %v837
        %928 = vmatprep.subr.bf16.mxu0 0
        %929 = vmatpush1.bf16.msra.mxu0 %v838
        %930 = vmatprep.subr.bf16.mxu0 0
        %931 = vmatpush1.bf16.msra.mxu0 %v839
        %932 = vmatprep.subr.bf16.mxu0 0
        %933 = vmatpush1.bf16.msra.mxu0 %v840
        %934 = vmatprep.subr.bf16.mxu0 0
        %935 = vmatpush1.bf16.msra.mxu0 %v841
        %936 = vmatprep.subr.bf16.mxu0 0
        %937 = vmatpush1.bf16.msra.mxu0 %v842
        %938 = vmatprep.subr.bf16.mxu0 0
        %939 = vmatpush1.bf16.msra.mxu0 %v843
        %940 = vmatprep.subr.bf16.mxu0 0
        %941 = vmatpush1.bf16.msra.mxu0 %v844
        %942 = vmatprep.subr.bf16.mxu0 0
        %943 = vmatpush1.bf16.msra.mxu0 %v845
        %944 = vmatprep.subr.bf16.mxu0 0
        %945 = vmatpush1.bf16.msra.mxu0 %v846
        %946 = vmatprep.subr.bf16.mxu0 0
        %947 = vmatpush1.bf16.msra.mxu0 %v847
        %948 = vmatprep.mubr.bf16.mxu0 %v659
        %949 = vmatmul.mubr.bf16.gmra.mrb[0].mxu0 %v658
        %v950 = vpop.f32.mrb[0].mxu0
        %v951 = vadd.f32 %v656, %v950
        %v952 = vpop.f32.mrb[0].mxu0
        %v953 = vpop.f32.mrb[0].mxu0
        %v954 = vadd.f32 %v656, %v953
        %v955 = vpop.f32.mrb[0].mxu0
        %956 = vmatprep.mubr.bf16.mxu0 %v663
        %957 = vmatmul.mubr.bf16.gmra.mrb[0].mxu0 %v661
        %v958 = vpop.f32.mrb[0].mxu0
        %v959 = vadd.f32 %v656, %v958
        %v960 = vpop.f32.mrb[0].mxu0
        %v961 = vpop.f32.mrb[0].mxu0
        %v962 = vadd.f32 %v656, %v961
        %v963 = vpop.f32.mrb[0].mxu0
        %964 = vmatprep.mubr.bf16.mxu0 %v667
        %965 = vmatmul.mubr.bf16.gmra.mrb[0].mxu0 %v665
        %v966 = vpop.f32.mrb[0].mxu0
        %v967 = vadd.f32 %v656, %v966
        %v968 = vpop.f32.mrb[0].mxu0
        %v969 = vpop.f32.mrb[0].mxu0
        %v970 = vadd.f32 %v656, %v969
        %v971 = vpop.f32.mrb[0].mxu0
        %972 = vmatprep.mubr.bf16.mxu0 %v671
        %973 = vmatmul.mubr.bf16.gmra.mrb[0].mxu0 %v669
        %v974 = vpop.f32.mrb[0].mxu0
        %v975 = vadd.f32 %v656, %v974
        %v976 = vpop.f32.mrb[0].mxu0
        %v977 = vpop.f32.mrb[0].mxu0
        %v978 = vadd.f32 %v656, %v977
        %v979 = vpop.f32.mrb[0].mxu0
        %980 = vdwg.mxu0
        %981 = vmatprep.subr.bf16.mxu0 0
        %982 = vmatpush1.bf16.msra.mxu0 %v848
        %983 = vmatprep.subr.bf16.mxu0 0
        %984 = vmatpush1.bf16.msra.mxu0 %v849
        %985 = vmatprep.subr.bf16.mxu0 0
        %986 = vmatpush1.bf16.msra.mxu0 %v850
        %987 = vmatprep.subr.bf16.mxu0 0
        %988 = vmatpush1.bf16.msra.mxu0 %v851
        %989 = vmatprep.subr.bf16.mxu0 0
        %990 = vmatpush1.bf16.msra.mxu0 %v852
        %991 = vmatprep.subr.bf16.mxu0 0
        %992 = vmatpush1.bf16.msra.mxu0 %v853
        %993 = vmatprep.subr.bf16.mxu0 0
        %994 = vmatpush1.bf16.msra.mxu0 %v854
        %995 = vmatprep.subr.bf16.mxu0 0
        %996 = vmatpush1.bf16.msra.mxu0 %v855
        %997 = vmatprep.subr.bf16.mxu0 0
        %998 = vmatpush1.bf16.msra.mxu0 %v856
        %999 = vmatprep.subr.bf16.mxu0 0
        %1000 = vmatpush1.bf16.msra.mxu0 %v857
        %1001 = vmatprep.subr.bf16.mxu0 0
        %1002 = vmatpush1.bf16.msra.mxu0 %v858
        %1003 = vmatprep.subr.bf16.mxu0 0
        %1004 = vmatpush1.bf16.msra.mxu0 %v859
        %1005 = vmatprep.subr.bf16.mxu0 0
        %1006 = vmatpush1.bf16.msra.mxu0 %v860
        %1007 = vmatprep.subr.bf16.mxu0 0
        %1008 = vmatpush1.bf16.msra.mxu0 %v861
        %1009 = vmatprep.subr.bf16.mxu0 0
        %1010 = vmatpush1.bf16.msra.mxu0 %v862
        %1011 = vmatprep.subr.bf16.mxu0 0
        %1012 = vmatpush1.bf16.msra.mxu0 %v863
        %1013 = vmatprep.mubr.bf16.mxu0 %v661
        %1014 = vmatmul.mubr.bf16.gmra.mrb[0].mxu0 %v660
        %v1015 = vpop.f32.mrb[0].mxu0
        %v1016 = vadd.f32 %v951, %v1015
        %v1017 = vpop.f32.mrb[0].mxu0
        %v1018 = vpop.f32.mrb[0].mxu0
        %v1019 = vadd.f32 %v954, %v1018
        %v1020 = vpop.f32.mrb[0].mxu0
        %1021 = vmatprep.mubr.bf16.mxu0 %v665
        %1022 = vmatmul.mubr.bf16.gmra.mrb[0].mxu0 %v664
        %v1023 = vpop.f32.mrb[0].mxu0
        %v1024 = vadd.f32 %v959, %v1023
        %v1025 = vpop.f32.mrb[0].mxu0
        %v1026 = vpop.f32.mrb[0].mxu0
        %v1027 = vadd.f32 %v962, %v1026
        %v1028 = vpop.f32.mrb[0].mxu0
        %1029 = vmatprep.mubr.bf16.mxu0 %v669
        %1030 = vmatmul.mubr.bf16.gmra.mrb[0].mxu0 %v668
        %v1031 = vpop.f32.mrb[0].mxu0
        %v1032 = vadd.f32 %v967, %v1031
        %v1033 = vpop.f32.mrb[0].mxu0
        %v1034 = vpop.f32.mrb[0].mxu0
        %v1035 = vadd.f32 %v970, %v1034
        %v1036 = vpop.f32.mrb[0].mxu0
        %1037 = vmatprep.mubr.bf16.mxu0 %v673
        %1038 = vmatmul.mubr.bf16.gmra.mrb[0].mxu0 %v672
        %v1039 = vpop.f32.mrb[0].mxu0
        %v1040 = vadd.f32 %v975, %v1039
        %v1041 = vpop.f32.mrb[0].mxu0
        %v1042 = vpop.f32.mrb[0].mxu0
        %v1043 = vadd.f32 %v978, %v1042
        %v1044 = vpop.f32.mrb[0].mxu0
        %1045 = vdwg.mxu0
        %1046 = vmatprep.subr.bf16.mxu0 0
        %1047 = vmatpush1.bf16.msra.mxu0 %v864
        %1048 = vmatprep.subr.bf16.mxu0 0
        %1049 = vmatpush1.bf16.msra.mxu0 %v865
        %1050 = vmatprep.subr.bf16.mxu0 0
        %1051 = vmatpush1.bf16.msra.mxu0 %v866
        %1052 = vmatprep.subr.bf16.mxu0 0
        %1053 = vmatpush1.bf16.msra.mxu0 %v867
        %1054 = vmatprep.subr.bf16.mxu0 0
        %1055 = vmatpush1.bf16.msra.mxu0 0
        %1056 = vmatprep.subr.bf16.mxu0 0
        %1057 = vmatpush1.bf16.msra.mxu0 0
        %1058 = vmatprep.subr.bf16.mxu0 0
        %1059 = vmatpush1.bf16.msra.mxu0 0
        %1060 = vmatprep.subr.bf16.mxu0 0
        %1061 = vmatpush1.bf16.msra.mxu0 0
        %1062 = vmatprep.subr.bf16.mxu0 0
        %1063 = vmatpush1.bf16.msra.mxu0 0
        %1064 = vmatprep.subr.bf16.mxu0 0
        %1065 = vmatpush1.bf16.msra.mxu0 0
        %1066 = vmatprep.subr.bf16.mxu0 0
        %1067 = vmatpush1.bf16.msra.mxu0 0
        %1068 = vmatprep.subr.bf16.mxu0 0
        %1069 = vmatpush1.bf16.msra.mxu0 0
        %1070 = vmatprep.subr.bf16.mxu0 0
        %1071 = vmatpush1.bf16.msra.mxu0 0
        %1072 = vmatprep.subr.bf16.mxu0 0
        %1073 = vmatpush1.bf16.msra.mxu0 0
        %1074 = vmatprep.subr.bf16.mxu0 0
        %1075 = vmatpush1.bf16.msra.mxu0 0
        %1076 = vmatprep.subr.bf16.mxu0 0
        %1077 = vmatpush1.bf16.msra.mxu0 0
        %1078 = vmatprep.mubr.bf16.mxu0 0
        %1079 = vmatmul.mubr.bf16.gmra.mrb[0].mxu0 %v905
        %v1080 = vpop.f32.mrb[0].mxu0
        %v1081 = vadd.f32 %v1016, %v1080
        %v1082 = vpop.f32.mrb[0].mxu0
        %v1083 = vpop.f32.mrb[0].mxu0
        %v1084 = vadd.f32 %v1019, %v1083
        %v1085 = vpop.f32.mrb[0].mxu0
        %1086 = vmatprep.mubr.bf16.mxu0 0
        %1087 = vmatmul.mubr.bf16.gmra.mrb[0].mxu0 %v908
        %v1088 = vpop.f32.mrb[0].mxu0
        %v1089 = vadd.f32 %v1024, %v1088
        %v1090 = vpop.f32.mrb[0].mxu0
        %v1091 = vpop.f32.mrb[0].mxu0
        %v1092 = vadd.f32 %v1027, %v1091
        %v1093 = vpop.f32.mrb[0].mxu0
        %1094 = vmatprep.mubr.bf16.mxu0 0
        %1095 = vmatmul.mubr.bf16.gmra.mrb[0].mxu0 %v911
        %v1096 = vpop.f32.mrb[0].mxu0
        %v1097 = vadd.f32 %v1032, %v1096
        %v1098 = vpop.f32.mrb[0].mxu0
        %v1099 = vpop.f32.mrb[0].mxu0
        %v1100 = vadd.f32 %v1035, %v1099
        %v1101 = vpop.f32.mrb[0].mxu0
        %1102 = vmatprep.mubr.bf16.mxu0 0
        %1103 = vmatmul.mubr.bf16.gmra.mrb[0].mxu0 %v914
        %v1104 = vpop.f32.mrb[0].mxu0
        %v1105 = vadd.f32 %v1040, %v1104
        %v1106 = vpop.f32.mrb[0].mxu0
        %v1107 = vpop.f32.mrb[0].mxu0
        %v1108 = vadd.f32 %v1043, %v1107
        %v1109 = vpop.f32.mrb[0].mxu0
        %1110 = vdwg.mxu0
        %v1111 = vpack.c.bf16 %v1081, %v1081
        %v1112 = vpack.c.bf16 %v1084, %v1084
        %v1113 = vpack.c.bf16 %v1089, %v1089
        %v1114 = vpack.c.bf16 %v1092, %v1092
        %v1115 = vpack.c.bf16 %v1097, %v1097
        %v1116 = vpack.c.bf16 %v1100, %v1100
        %v1117 = vpack.c.bf16 %v1105, %v1105
        %v1118 = vpack.c.bf16 %v1108, %v1108
        %1119 = vst [vmem:[%s203] sm:$0xf] %v1111
        %1120 = vst [vmem:[%s203 + $0x4] sm:$0xf] %v1112
        %1121 = vst [vmem:[%s203 + $0x8] sm:$0xf] %v1113
        %1122 = vst [vmem:[%s203 + $0xc] sm:$0xf] %v1114
        %1123 = vst [vmem:[%s203 + $0x10] sm:$0xf] %v1115
        %1124 = vst [vmem:[%s203 + $0x14] sm:$0xf] %v1116
        %1125 = vst [vmem:[%s203 + $0x18] sm:$0xf] %v1117
        %1126 = vst [vmem:[%s203 + $0x1c] sm:$0xf] %v1118
        %s1127 = sand.u32 %s97, 1
        %s1128 = scalar_lea.sflag [#allocation4], %s1127
        %s1129 = sand.u32 %s97, 1
        %s1130 = smul.addr %s1129, 32
        %s1131 = scalar_lea.vmem [#allocation7], %s1130
        // Predicated region
        $region41: #{tpu_custom_call.1} parent=31 // pred_check
          %p1132 = pneg %p107
        $region42: #{tpu_custom_call.1} parent=31 // pred_check_branch
          %1134 = sbr.rel (%p1132) target = $region44
        $region43: #{tpu_custom_call.1} parent=31 // pred_region
          %s1136 = ssub.s32 512, 512
          %1137 = vsyncadd %s1128, %s1136
          %s1138 = smul.addr %s21, 8
          %s1139 = smul.addr %s1138, 64
          %s1140 = scalar_lea.hbm %s3, %s1139
          %s1141 = sshll.u32 %s1131, 4
          %s1142 = int_to_ptr.vmem [resolvable:$true] %s1141
          %1147 = dma.vmem_to_hbm [thread:$0]  %s1142, 512, %s1140, %s1128, 64, 64, 4
        $region44: #{tpu_custom_call.1} parent=31 // pred_fallthru
          _
      $region32: #{tpu_custom_call.1} parent=5 // pred_fallthru
        _
      %p1148 = scmp.le.s32.totalorder 2, %s16
      // Predicated region
      $region45: #{tpu_custom_call.1} parent=5 // pred_check
        %p1149 = pneg %p1148
      $region46: #{tpu_custom_call.1} parent=5 // pred_check_branch
        %1151 = sbr.rel (%p1149) target = $region48
      $region47: #{tpu_custom_call.1} parent=5 // pred_region
        %s1152 = ssub.s32 %s16, 2
        // Predicated region
        $region49: #{tpu_custom_call.1} parent=47 // pred_check
          %p1153 = pneg %p113
        $region50: #{tpu_custom_call.1} parent=47 // pred_check_branch
          %1155 = sbr.rel (%p1153) target = $region52
        $region51: #{tpu_custom_call.1} parent=47 // pred_region
          %s1156 = sand.u32 %s98, 1
          %s1157 = scalar_lea.sflag [#allocation4], %s1156
          %s1158 = sand.u32 %s98, 1
          %s1159 = smul.addr %s1158, 32
          %s1160 = scalar_lea.vmem [#allocation7], %s1159
          %1161 = dma.done %s1157, 512
        $region52: #{tpu_custom_call.1} parent=47 // pred_fallthru
          _
      $region48: #{tpu_custom_call.1} parent=5 // pred_fallthru
        _
    $region6: #{tpu_custom_call.1} parent=1 // loop_footer
      %s20 = sadd.s32 1, %s16
    $region7: #{tpu_custom_call.1} parent=1 // loop_footer_branch
      %15 = sbr.rel target = $region3
    $region8: #{tpu_custom_call.1} parent=1 // loop_exit
      _
    %1162 = vsyncpa [#allocation3], 1
    %s1163 = scalar_lea.sflag [#allocation3], 1
    %1164 = vsyncpa %s1163, 1
    %1165 = vsyncpa [#allocation6], 1
    %1166 = vsyncpa [#allocation4], 1
    %s1167 = scalar_lea.sflag [#allocation4], 1
    %1168 = vsyncpa %s1167, 1

</llo_original>
